<compile_context>
chip_gen: v5e
topology: v5e:2x2
jax: 0.10.0
libtpu: 0.0.40
codegen_flags: <defaults>
</compile_context>

<pallas_src>
import jax
import jax.numpy as jnp
from jax.experimental import pallas as pl
from jax.experimental.pallas import tpu as pltpu


FC_PAD = 128  # pad the 32-wide fc bottleneck to a full lane width


def projection_head_kernel(x_ref, w1_ref, w2_ref, fcw1_ref, fcw2_ref,
                           shifts_ref, o_ref):
    P = w1_ref.shape[1]      # proj_dim
    Fp = fcw1_ref.shape[1]   # padded fc bottleneck width (128)
    Q = fcw2_ref.shape[1]    # pretext_dim

    x = x_ref[...].astype(jnp.bfloat16)

    # Block 1: Linear(P,P) with BN1 scale pre-folded into w1; add BN1 shift; ReLU.
    h = jnp.dot(x, w1_ref[...], preferred_element_type=jnp.float32)
    h = jnp.maximum(h + shifts_ref[0:1, :P], 0.0)

    # Block 2: Linear(P,P) with BN2 scale pre-folded; shift; ReLU.
    h = jnp.dot(h.astype(jnp.bfloat16), w2_ref[...],
                preferred_element_type=jnp.float32)
    h = jnp.maximum(h + shifts_ref[1:2, :P], 0.0)

    # fc part 1: Linear(P,32)+b -> ReLU, padded to 128 lanes.
    # Dropout(p=0.5) in eval mode is the identity map.
    h = jnp.dot(h.astype(jnp.bfloat16), fcw1_ref[...],
                preferred_element_type=jnp.float32)
    h = jnp.maximum(h + shifts_ref[2:3, :Fp], 0.0)

    # fc part 2: Linear(32,Q)+b with the final BN1d(affine=False) folded in.
    h = jnp.dot(h.astype(jnp.bfloat16), fcw2_ref[...],
                preferred_element_type=jnp.float32)
    h = h + shifts_ref[3:4, :Q]

    o_ref[...] = h.astype(o_ref.dtype)


def projection_head(x_flat, kparams, *, tile_b=None):
    """x_flat: (B, P) float32. kparams from prepare_kernel_params. Returns (B, Q) f32."""
    B, P = x_flat.shape
    Q = kparams["fcw2"].shape[1]

    if tile_b is None:
        if B % 256 == 0:
            tile_b = 128        # fills MXU rows, >=2 parallel grid steps
        elif B % 16 == 0:
            tile_b = B // 2     # keep 2 steps so v7x uses both TensorCores
        else:
            tile_b = B          # whole (small) batch in one block
    assert B % tile_b == 0

    def full(arr):
        return pl.BlockSpec(arr.shape, lambda i: (0,) * arr.ndim)

    # TODO(synk): for proj_dim >~ 2k on v7x (64 MiB VMEM), K-tile w1/w2 with an
    # inner "arbitrary" reduction axis instead of whole-weight blocks.
    return pl.pallas_call(
        projection_head_kernel,
        out_shape=jax.ShapeDtypeStruct((B, Q), jnp.float32),
        grid_spec=pltpu.PrefetchScalarGridSpec(
            num_scalar_prefetch=0,
            grid=(B // tile_b,),
            in_specs=[
                pl.BlockSpec((tile_b, P), lambda i: (i, 0)),   # x batch tile
                full(kparams["w1"]), full(kparams["w2"]),
                full(kparams["fcw1"]), full(kparams["fcw2"]),
                full(kparams["shifts"]),
            ],
            out_specs=pl.BlockSpec((tile_b, Q), lambda i: (i, 0)),
        ),
        compiler_params=pltpu.CompilerParams(
            dimension_semantics=("parallel",)),
    )(x_flat, kparams["w1"], kparams["w2"], kparams["fcw1"], kparams["fcw2"],
      kparams["shifts"])


def prepare_kernel_params(p):
    """Offline folding / padding / dtype prep (exact math, done once)."""
    P = p["w1"].shape[0]
    Q = p["fcw2"].shape[1]
    fc_hidden = p["fcw1"].shape[1]   # 32

    # Fold BN scales into the preceding bias-free Linear weights (per-output-feature).
    w1f = p["w1"] * p["bn1_scale"]                      # (P,P) * (1,P)
    w2f = p["w2"] * p["bn2_scale"]
    # Fold the final affine-free BN (pure affine, no ReLU after fcw2) into fc2.
    fcw2f = p["fcw2"] * p["bn3_scale"]                  # (32,Q) * (1,Q)
    fcb2f = p["fcb2"] * p["bn3_scale"] + p["bn3_shift"]

    # Zero-pad the 32-wide bottleneck to FC_PAD lanes (exact: ReLU(0)=0 and the
    # extra fcw2 rows are zero).
    fcw1p = jnp.zeros((P, FC_PAD), jnp.float32).at[:, :fc_hidden].set(p["fcw1"])
    fcb1p = jnp.zeros((1, FC_PAD), jnp.float32).at[:, :fc_hidden].set(p["fcb1"])
    fcw2p = jnp.zeros((FC_PAD, Q), jnp.float32).at[:fc_hidden, :].set(fcw2f)

    # Stack the four remaining per-feature vectors into one (4, D) f32 operand.
    D = max(P, FC_PAD, Q)
    shifts = jnp.zeros((4, D), jnp.float32)
    shifts = shifts.at[0, :P].set(p["bn1_shift"][0])
    shifts = shifts.at[1, :P].set(p["bn2_shift"][0])
    shifts = shifts.at[2, :FC_PAD].set(fcb1p[0])
    shifts = shifts.at[3, :Q].set(fcb2f[0])

    return {
        "w1": w1f.astype(jnp.bfloat16),
        "w2": w2f.astype(jnp.bfloat16),
        "fcw1": fcw1p.astype(jnp.bfloat16),
        "fcw2": fcw2p.astype(jnp.bfloat16),
        "shifts": shifts,                  # f32 epilogue operands
    }


def init_params(key, proj_dim, pretext_dim):
    """Deterministic synthetic parameters matching Projection_head.__init__ shapes.

    PyTorch Linear weight is (out,in) computing x @ W.T; we store W.T = (in,out).
    BatchNorm1d (eval mode) is expressed as scale = gamma/sqrt(var+eps),
    shift = beta - mean*scale. Last BN has affine=False (gamma=1, beta=0).
    """
    ks = jax.random.split(key, 12)
    eps = 1e-5

    def bn_fold(kmean, kvar, dim):
        mean = 0.1 * jax.random.normal(kmean, (1, dim), jnp.float32)
        var = 1.0 + 0.1 * jax.random.uniform(kvar, (1, dim), jnp.float32)
        gamma = jnp.ones((1, dim), jnp.float32)
        beta = jnp.zeros((1, dim), jnp.float32)
        scale = gamma / jnp.sqrt(var + eps)
        shift = beta - mean * scale
        return scale, shift

    P, Q = proj_dim, pretext_dim
    params = {}
    params["w1"] = 0.05 * jax.random.normal(ks[0], (P, P), jnp.float32)
    params["bn1_scale"], params["bn1_shift"] = bn_fold(ks[1], ks[2], P)
    params["w2"] = 0.05 * jax.random.normal(ks[3], (P, P), jnp.float32)
    params["bn2_scale"], params["bn2_shift"] = bn_fold(ks[4], ks[5], P)
    params["fcw1"] = 0.05 * jax.random.normal(ks[6], (P, 32), jnp.float32)
    params["fcb1"] = 0.01 * jax.random.normal(ks[7], (1, 32), jnp.float32)
    params["fcw2"] = 0.05 * jax.random.normal(ks[8], (32, Q), jnp.float32)
    params["fcb2"] = 0.01 * jax.random.normal(ks[9], (1, Q), jnp.float32)
    params["bn3_scale"], params["bn3_shift"] = bn_fold(ks[10], ks[11], Q)
    return params


def reference_forward(x_flat, p):
    """Pure-f32 reference of the original (unfolded) eval-mode module."""
    h = x_flat @ p["w1"]
    h = jnp.maximum(h * p["bn1_scale"] + p["bn1_shift"], 0.0)
    h = h @ p["w2"]
    h = jnp.maximum(h * p["bn2_scale"] + p["bn2_shift"], 0.0)
    h = jnp.maximum(h @ p["fcw1"] + p["fcb1"], 0.0)
    h = h @ p["fcw2"] + p["fcb2"]
    return h * p["bn3_scale"] + p["bn3_shift"]


if __name__ == "__main__":
    key = jax.random.PRNGKey(0)
    k_x, k_p = jax.random.split(key)

    # batch=256 so the kernel runs two 128-row MXU-filling "parallel" tiles;
    # NCHW input (256, 4, 4, 8) -> flatten -> proj_dim = 128, pretext_dim = 128.
    B, C, H, W = 256, 4, 4, 8
    proj_dim = C * H * W      # 128
    pretext_dim = 128

    x = jax.random.normal(k_x, (B, C, H, W), jnp.float32)
    x_flat = x.reshape(B, -1)          # nn.Flatten()

    params = init_params(k_p, proj_dim, pretext_dim)
    kparams = prepare_kernel_params(params)

    out = jax.block_until_ready(projection_head(x_flat, kparams))

    ref = reference_forward(x_flat, params)
    assert out.shape == (B, pretext_dim)
    # bf16 weights/activations in the kernel vs. f32 reference of the original
    # (unfolded) module -> loose but meaningful tolerance.
    assert jnp.allclose(out, ref, atol=2e-2, rtol=2e-2), \
        float(jnp.max(jnp.abs(out - ref)))

    print("KERNEL_OK")
</pallas_src>

<mosaic_0001>
module attributes {stable_mosaic.version = 11 : i64} {
  func.func @projection_head_kernel(%arg0: i32, %arg1: memref<128x128xf32, #tpu.memory_space<vmem>>, %arg2: memref<128x128xbf16, #tpu.memory_space<vmem>>, %arg3: memref<128x128xbf16, #tpu.memory_space<vmem>>, %arg4: memref<128x128xbf16, #tpu.memory_space<vmem>>, %arg5: memref<128x128xbf16, #tpu.memory_space<vmem>>, %arg6: memref<4x128xf32, #tpu.memory_space<vmem>>, %arg7: memref<128x128xf32, #tpu.memory_space<vmem>>) attributes {dimension_semantics = [#tpu.dimension_semantics<parallel>], iteration_bounds = array<i64: 2>, scalar_prefetch = 0 : i64, scratch_operands = 0 : i64, tpu.core_type = #tpu.core_type<tc>, window_params = [{transform_indices = @transform_0, window_bounds = array<i64: 128, 128>}, {pipeline_mode = #tpu.pipeline_mode<synchronous>, transform_indices = @transform_1, window_bounds = array<i64: 128, 128>}, {pipeline_mode = #tpu.pipeline_mode<synchronous>, transform_indices = @transform_2, window_bounds = array<i64: 128, 128>}, {pipeline_mode = #tpu.pipeline_mode<synchronous>, transform_indices = @transform_3, window_bounds = array<i64: 128, 128>}, {pipeline_mode = #tpu.pipeline_mode<synchronous>, transform_indices = @transform_4, window_bounds = array<i64: 128, 128>}, {pipeline_mode = #tpu.pipeline_mode<synchronous>, transform_indices = @transform_5, window_bounds = array<i64: 4, 128>}, {transform_indices = @transform_6, window_bounds = array<i64: 128, 128>}]} {
    %c0 = arith.constant 0 : index
    %c0_0 = arith.constant 0 : index
    %0 = vector.load %arg1[%c0, %c0_0] : memref<128x128xf32, #tpu.memory_space<vmem>>, vector<128x128xf32>
    %1 = arith.truncf %0 : vector<128x128xf32> to vector<128x128xbf16>
    %c0_1 = arith.constant 0 : index
    %c0_2 = arith.constant 0 : index
    %2 = vector.load %arg2[%c0_1, %c0_2] : memref<128x128xbf16, #tpu.memory_space<vmem>>, vector<128x128xbf16>
    %cst = arith.constant dense<0.000000e+00> : vector<128x128xf32>
    %3 = tpu.matmul %1, %2, %cst {dimension_numbers = #tpu.dot_dimension_numbers<[1], [0], [0], [1], [0, 0, 1, 1], [], []>} : vector<128x128xbf16>, vector<128x128xbf16>, vector<128x128xf32> -> vector<128x128xf32>
    %c0_3 = arith.constant 0 : index
    %c0_4 = arith.constant 0 : index
    %4 = vector.load %arg6[%c0_3, %c0_4] : memref<4x128xf32, #tpu.memory_space<vmem>>, vector<1x128xf32>
    %5 = vector.broadcast %4 : vector<1x128xf32> to vector<128x128xf32>
    %6 = arith.addf %3, %5 : vector<128x128xf32>
    %cst_5 = arith.constant 0.000000e+00 : f32
    %7 = vector.broadcast %cst_5 : f32 to vector<128x128xf32>
    %8 = arith.maximumf %6, %7 : vector<128x128xf32>
    %9 = arith.truncf %8 : vector<128x128xf32> to vector<128x128xbf16>
    %c0_6 = arith.constant 0 : index
    %c0_7 = arith.constant 0 : index
    %10 = vector.load %arg3[%c0_6, %c0_7] : memref<128x128xbf16, #tpu.memory_space<vmem>>, vector<128x128xbf16>
    %cst_8 = arith.constant dense<0.000000e+00> : vector<128x128xf32>
    %11 = tpu.matmul %9, %10, %cst_8 {dimension_numbers = #tpu.dot_dimension_numbers<[1], [0], [0], [1], [0, 0, 1, 1], [], []>} : vector<128x128xbf16>, vector<128x128xbf16>, vector<128x128xf32> -> vector<128x128xf32>
    %c1 = arith.constant 1 : index
    %c0_9 = arith.constant 0 : index
    %12 = vector.load %arg6[%c1, %c0_9] : memref<4x128xf32, #tpu.memory_space<vmem>>, vector<1x128xf32>
    %13 = vector.broadcast %12 : vector<1x128xf32> to vector<128x128xf32>
    %14 = arith.addf %11, %13 : vector<128x128xf32>
    %cst_10 = arith.constant 0.000000e+00 : f32
    %15 = vector.broadcast %cst_10 : f32 to vector<128x128xf32>
    %16 = arith.maximumf %14, %15 : vector<128x128xf32>
    %17 = arith.truncf %16 : vector<128x128xf32> to vector<128x128xbf16>
    %c0_11 = arith.constant 0 : index
    %c0_12 = arith.constant 0 : index
    %18 = vector.load %arg4[%c0_11, %c0_12] : memref<128x128xbf16, #tpu.memory_space<vmem>>, vector<128x128xbf16>
    %cst_13 = arith.constant dense<0.000000e+00> : vector<128x128xf32>
    %19 = tpu.matmul %17, %18, %cst_13 {dimension_numbers = #tpu.dot_dimension_numbers<[1], [0], [0], [1], [0, 0, 1, 1], [], []>} : vector<128x128xbf16>, vector<128x128xbf16>, vector<128x128xf32> -> vector<128x128xf32>
    %c2 = arith.constant 2 : index
    %c0_14 = arith.constant 0 : index
    %20 = vector.load %arg6[%c2, %c0_14] : memref<4x128xf32, #tpu.memory_space<vmem>>, vector<1x128xf32>
    %21 = vector.broadcast %20 : vector<1x128xf32> to vector<128x128xf32>
    %22 = arith.addf %19, %21 : vector<128x128xf32>
    %cst_15 = arith.constant 0.000000e+00 : f32
    %23 = vector.broadcast %cst_15 : f32 to vector<128x128xf32>
    %24 = arith.maximumf %22, %23 : vector<128x128xf32>
    %25 = arith.truncf %24 : vector<128x128xf32> to vector<128x128xbf16>
    %c0_16 = arith.constant 0 : index
    %c0_17 = arith.constant 0 : index
    %26 = vector.load %arg5[%c0_16, %c0_17] : memref<128x128xbf16, #tpu.memory_space<vmem>>, vector<128x128xbf16>
    %cst_18 = arith.constant dense<0.000000e+00> : vector<128x128xf32>
    %27 = tpu.matmul %25, %26, %cst_18 {dimension_numbers = #tpu.dot_dimension_numbers<[1], [0], [0], [1], [0, 0, 1, 1], [], []>} : vector<128x128xbf16>, vector<128x128xbf16>, vector<128x128xf32> -> vector<128x128xf32>
    %c3 = arith.constant 3 : index
    %c0_19 = arith.constant 0 : index
    %28 = vector.load %arg6[%c3, %c0_19] : memref<4x128xf32, #tpu.memory_space<vmem>>, vector<1x128xf32>
    %29 = vector.broadcast %28 : vector<1x128xf32> to vector<128x128xf32>
    %30 = arith.addf %27, %29 : vector<128x128xf32>
    %c0_20 = arith.constant 0 : index
    %c0_21 = arith.constant 0 : index
    %31 = vector.load %arg7[%c0_20, %c0_21] : memref<128x128xf32, #tpu.memory_space<vmem>>, vector<128x128xf32>
    tpu.vector_store %arg7[%c0_20, %c0_21], %30 {strides = array<i32>} : memref<128x128xf32, #tpu.memory_space<vmem>>, vector<128x128xf32>,
    return
  }
  func.func @transform_0(%arg0: i32) -> (i32, i32) {
    %c0_i32 = arith.constant 0 : i32
    %c0_i32_0 = arith.constant 0 : i32
    return %arg0, %c0_i32 : i32, i32
  }
  func.func @transform_1(%arg0: i32) -> (i32, i32) {
    %c0_i32 = arith.constant 0 : i32
    %c0_i32_0 = arith.constant 0 : i32
    %c0_i32_1 = arith.constant 0 : i32
    return %c0_i32, %c0_i32_0 : i32, i32
  }
  func.func @transform_2(%arg0: i32) -> (i32, i32) {
    %c0_i32 = arith.constant 0 : i32
    %c0_i32_0 = arith.constant 0 : i32
    %c0_i32_1 = arith.constant 0 : i32
    return %c0_i32, %c0_i32_0 : i32, i32
  }
  func.func @transform_3(%arg0: i32) -> (i32, i32) {
    %c0_i32 = arith.constant 0 : i32
    %c0_i32_0 = arith.constant 0 : i32
    %c0_i32_1 = arith.constant 0 : i32
    return %c0_i32, %c0_i32_0 : i32, i32
  }
  func.func @transform_4(%arg0: i32) -> (i32, i32) {
    %c0_i32 = arith.constant 0 : i32
    %c0_i32_0 = arith.constant 0 : i32
    %c0_i32_1 = arith.constant 0 : i32
    return %c0_i32, %c0_i32_0 : i32, i32
  }
  func.func @transform_5(%arg0: i32) -> (i32, i32) {
    %c0_i32 = arith.constant 0 : i32
    %c0_i32_0 = arith.constant 0 : i32
    %c0_i32_1 = arith.constant 0 : i32
    return %c0_i32, %c0_i32_0 : i32, i32
  }
  func.func @transform_6(%arg0: i32) -> (i32, i32) {
    %c0_i32 = arith.constant 0 : i32
    %c0_i32_0 = arith.constant 0 : i32
    return %arg0, %c0_i32 : i32, i32
  }
}

</mosaic_0001>

<llo_original>
// kernel: tpu_custom_call.1
$region0: #{tpu_custom_call.1}
  #allocation0 [shape = 'u32[]', space=smem, size = 0x4, offset = 0x4, fixed_abs, tag = 'smem constant byte address 0x4 - core index']
  #allocation1 [shape = 'u32[72,128]{1,0:T(1,128)}', space=vmem, size = 0x9000, scoped, tag = 'internal scratch']
  %s0 = inlined_call_operand.hbm [shape: f32[256,128], index: 0, kind: input, shape index: {}]
  %s1 = inlined_call_operand.hbm [shape: bf16[128,128], index: 1, kind: input, shape index: {}]
  %s2 = inlined_call_operand.hbm [shape: bf16[128,128], index: 2, kind: input, shape index: {}]
  %s3 = inlined_call_operand.hbm [shape: bf16[128,128], index: 3, kind: input, shape index: {}]
  %s4 = inlined_call_operand.hbm [shape: bf16[128,128], index: 4, kind: input, shape index: {}]
  %s5 = inlined_call_operand.vmem [shape: f32[4,128], index: 5, kind: input, shape index: {}]
  %s6 = inlined_call_operand.hbm [shape: f32[256,128], index: 6, kind: output, shape index: {}]
  %s7 = sld [smem:[#allocation0]]
  $region77: #{tpu_custom_call.1} parent=0
    _
  %s9 = ssub.s32 1, %s7
  %s10 = scalar_select 0, %s9, %s7
  $region1: #{tpu_custom_call.1} parent=0
    #allocation2 [shape = 'u8[131072]{0}', space=vmem, size = 0x20000, scoped, tag = 'input window, operand 0']
    #allocation3 [shape = 's32[2]{0}', space=sflag, size = 0x8, scoped, tag = 'scoped memory for tpu_custom_call.1']
    #allocation4 [shape = 's32[2]{0}', space=sflag, size = 0x8, scoped, tag = 'scoped memory for tpu_custom_call.1']
    #allocation5 [shape = 'u8[32768]{0}', space=vmem, size = 0x8000, scoped, tag = 'input window, operand 1, single buffered']
    #allocation6 [shape = 's32[1]{0}', space=sflag, size = 0x4, scoped, tag = 'scoped memory for tpu_custom_call.1']
    #allocation7 [shape = 'u8[32768]{0}', space=vmem, size = 0x8000, scoped, tag = 'input window, operand 2, single buffered']
    #allocation8 [shape = 'u8[32768]{0}', space=vmem, size = 0x8000, scoped, tag = 'input window, operand 3, single buffered']
    #allocation9 [shape = 's32[1]{0}', space=sflag, size = 0x4, scoped, tag = 'scoped memory for tpu_custom_call.1']
    #allocation10 [shape = 'u8[32768]{0}', space=vmem, size = 0x8000, scoped, tag = 'input window, operand 4, single buffered']
    #allocation11 [shape = 'u8[131072]{0}', space=vmem, size = 0x20000, scoped, tag = 'output window, operand 0']
    %11 = vsyncpa [#allocation3], 0
    %s12 = scalar_lea.sflag [#allocation3], 1
    %13 = vsyncpa %s12, 0
    %14 = vsyncpa [#allocation6], 0
    %15 = vsyncpa [#allocation9], 0
    %16 = vsyncpa [#allocation4], 0
    %s17 = scalar_lea.sflag [#allocation4], 1
    %18 = vsyncpa %s17, 0
    loop: start=0, step=1, limit=4
    $region2: #{tpu_custom_call.1} parent=1 // loop_pre_header
      _
    $region3: #{tpu_custom_call.1} parent=1 // loop_header
      %s20 = sphi 0, %s24
      %p21 = scmp.ge.s32.totalorder %s20, 4
      %s30 = sphi 0, %s32
      %s33 = sphi 0, %s30
      %s34 = sphi 0, %s33
      %s50 = sphi 0, %s34
      %s54 = sphi 0, %s54
      %s56 = sphi 0, %s54
      %s57 = sphi 0, %s56
      %s71 = sphi 0, %s57
      %s75 = sphi 0, %s75
      %s77 = sphi 0, %s75
      %s78 = sphi 0, %s77
      %s92 = sphi 0, %s78
      %s96 = sphi 0, %s96
      %s98 = sphi 0, %s96
      %s99 = sphi 0, %s98
      %s113 = sphi 0, %s99
      %s117 = sphi 0, %s117
      %s119 = sphi 0, %s117
      %s120 = sphi 0, %s119
      %s134 = sphi 0, %s120
      %s138 = sphi 0, %s138
      %s140 = sphi 0, %s138
      %s141 = sphi 0, %s140
      %s155 = sphi 0, %s141
      %s161 = sphi 0, %s163
      %s164 = sphi 0, %s161
      %s165 = sphi 0, %s164
      %s181 = sphi 0, %s165
    $region4: #{tpu_custom_call.1} parent=1 // loop_header_branch
      %23 = sbr.rel (%p21) target = $region8
    $region5: #{tpu_custom_call.1} parent=1 // loop_body
      %s25 = ssub.s32 %s20, 1
      %s26 = ssub.s32 %s20, 2
      %s27 = sadd.s32 %s20, 1
      %s28 = ssub.s32 %s20, %s27
      %p29 = scmp.eq.s32.totalorder %s28, 0
      %s31 = sadd.s32 %s30, 1
      %s32 = scalar_select %p29, %s30, %s31
      %p35 = pneg %p29
      %p36 = scmp.eq.s32.totalorder %s20, 1
      %p37 = por %p35, %p36
      %p38 = scmp.ne.s32.totalorder %s30, %s33
      %p39 = scmp.eq.s32.totalorder %s20, 0
      %p40 = por %p38, %p39
      %p41 = scmp.ne.s32.totalorder %s30, %s33
      %p42 = scmp.eq.s32.totalorder %s25, 1
      %p43 = por %p41, %p42
      %p44 = scmp.ne.s32.totalorder %s33, %s34
      %p45 = scmp.eq.s32.totalorder %s25, 0
      %p46 = por %p44, %p45
      %p47 = scmp.ne.s32.totalorder %s33, %s34
      %p48 = scmp.eq.s32.totalorder %s26, 1
      %p49 = por %p47, %p48
      %p51 = scmp.ne.s32.totalorder %s34, %s50
      %p52 = scmp.eq.s32.totalorder %s26, 0
      %p53 = por %p51, %p52
      %s55 = sadd.s32 %s54, 1
      %p58 = scmp.eq.s32.totalorder %s20, 1
      %p59 = scmp.ne.s32.totalorder %s54, %s56
      %p60 = scmp.eq.s32.totalorder %s20, 0
      %p61 = por %p59, %p60
      %p62 = scmp.ne.s32.totalorder %s54, %s56
      %p63 = scmp.eq.s32.totalorder %s25, 1
      %p64 = por %p62, %p63
      %p65 = scmp.ne.s32.totalorder %s56, %s57
      %p66 = scmp.eq.s32.totalorder %s25, 0
      %p67 = por %p65, %p66
      %p68 = scmp.ne.s32.totalorder %s56, %s57
      %p69 = scmp.eq.s32.totalorder %s26, 1
      %p70 = por %p68, %p69
      %p72 = scmp.ne.s32.totalorder %s57, %s71
      %p73 = scmp.eq.s32.totalorder %s26, 0
      %p74 = por %p72, %p73
      %s76 = sadd.s32 %s75, 1
      %p79 = scmp.eq.s32.totalorder %s20, 1
      %p80 = scmp.ne.s32.totalorder %s75, %s77
      %p81 = scmp.eq.s32.totalorder %s20, 0
      %p82 = por %p80, %p81
      %p83 = scmp.ne.s32.totalorder %s75, %s77
      %p84 = scmp.eq.s32.totalorder %s25, 1
      %p85 = por %p83, %p84
      %p86 = scmp.ne.s32.totalorder %s77, %s78
      %p87 = scmp.eq.s32.totalorder %s25, 0
      %p88 = por %p86, %p87
      %p89 = scmp.ne.s32.totalorder %s77, %s78
      %p90 = scmp.eq.s32.totalorder %s26, 1
      %p91 = por %p89, %p90
      %p93 = scmp.ne.s32.totalorder %s78, %s92
      %p94 = scmp.eq.s32.totalorder %s26, 0
      %p95 = por %p93, %p94
      %s97 = sadd.s32 %s96, 1
      %p100 = scmp.eq.s32.totalorder %s20, 1
      %p101 = scmp.ne.s32.totalorder %s96, %s98
      %p102 = scmp.eq.s32.totalorder %s20, 0
      %p103 = por %p101, %p102
      %p104 = scmp.ne.s32.totalorder %s96, %s98
      %p105 = scmp.eq.s32.totalorder %s25, 1
      %p106 = por %p104, %p105
      %p107 = scmp.ne.s32.totalorder %s98, %s99
      %p108 = scmp.eq.s32.totalorder %s25, 0
      %p109 = por %p107, %p108
      %p110 = scmp.ne.s32.totalorder %s98, %s99
      %p111 = scmp.eq.s32.totalorder %s26, 1
      %p112 = por %p110, %p111
      %p114 = scmp.ne.s32.totalorder %s99, %s113
      %p115 = scmp.eq.s32.totalorder %s26, 0
      %p116 = por %p114, %p115
      %s118 = sadd.s32 %s117, 1
      %p121 = scmp.eq.s32.totalorder %s20, 1
      %p122 = scmp.ne.s32.totalorder %s117, %s119
      %p123 = scmp.eq.s32.totalorder %s20, 0
      %p124 = por %p122, %p123
      %p125 = scmp.ne.s32.totalorder %s117, %s119
      %p126 = scmp.eq.s32.totalorder %s25, 1
      %p127 = por %p125, %p126
      %p128 = scmp.ne.s32.totalorder %s119, %s120
      %p129 = scmp.eq.s32.totalorder %s25, 0
      %p130 = por %p128, %p129
      %p131 = scmp.ne.s32.totalorder %s119, %s120
      %p132 = scmp.eq.s32.totalorder %s26, 1
      %p133 = por %p131, %p132
      %p135 = scmp.ne.s32.totalorder %s120, %s134
      %p136 = scmp.eq.s32.totalorder %s26, 0
      %p137 = por %p135, %p136
      %s139 = sadd.s32 %s138, 1
      %p142 = scmp.eq.s32.totalorder %s20, 1
      %p143 = scmp.ne.s32.totalorder %s138, %s140
      %p144 = scmp.eq.s32.totalorder %s20, 0
      %p145 = por %p143, %p144
      %p146 = scmp.ne.s32.totalorder %s138, %s140
      %p147 = scmp.eq.s32.totalorder %s25, 1
      %p148 = por %p146, %p147
      %p149 = scmp.ne.s32.totalorder %s140, %s141
      %p150 = scmp.eq.s32.totalorder %s25, 0
      %p151 = por %p149, %p150
      %p152 = scmp.ne.s32.totalorder %s140, %s141
      %p153 = scmp.eq.s32.totalorder %s26, 1
      %p154 = por %p152, %p153
      %p156 = scmp.ne.s32.totalorder %s141, %s155
      %p157 = scmp.eq.s32.totalorder %s26, 0
      %p158 = por %p156, %p157
      %s159 = ssub.s32 %s20, %s27
      %p160 = scmp.eq.s32.totalorder %s159, 0
      %s162 = sadd.s32 %s161, 1
      %s163 = scalar_select %p160, %s161, %s162
      %p166 = pneg %p160
      %p167 = scmp.eq.s32.totalorder %s20, 1
      %p168 = por %p166, %p167
      %p169 = scmp.ne.s32.totalorder %s161, %s164
      %p170 = scmp.eq.s32.totalorder %s20, 0
      %p171 = por %p169, %p170
      %p172 = scmp.ne.s32.totalorder %s161, %s164
      %p173 = scmp.eq.s32.totalorder %s25, 1
      %p174 = por %p172, %p173
      %p175 = scmp.ne.s32.totalorder %s164, %s165
      %p176 = scmp.eq.s32.totalorder %s25, 0
      %p177 = por %p175, %p176
      %p178 = scmp.ne.s32.totalorder %s164, %s165
      %p179 = scmp.eq.s32.totalorder %s26, 1
      %p180 = por %p178, %p179
      %p182 = scmp.ne.s32.totalorder %s165, %s181
      %p183 = scmp.eq.s32.totalorder %s26, 0
      %p184 = por %p182, %p183
      %p185 = scmp.le.s32.totalorder 1, %s20
      %p186 = scmp.lt.s32.totalorder %s20, 3
      %p187 = pnand %p185, %p186
      %p188 = pneg %p187
      // Predicated region
      $region9: #{tpu_custom_call.1} parent=5 // pred_check
        _
      $region10: #{tpu_custom_call.1} parent=5 // pred_check_branch
        %190 = sbr.rel (%p187) target = $region12
      $region11: #{tpu_custom_call.1} parent=5 // pred_region
        %s191 = ssub.s32 %s20, 1
        // Predicated region
        $region13: #{tpu_custom_call.1} parent=11 // pred_check
          %p192 = pneg %p67
        $region14: #{tpu_custom_call.1} parent=11 // pred_check_branch
          %194 = sbr.rel (%p192) target = $region16
        $region15: #{tpu_custom_call.1} parent=11 // pred_region
          %196 = vsyncadd [#allocation6], 0
          %s197 = sshll.u32 %s1, 4
          %s198 = int_to_ptr.hbm [resolvable:$true] %s197
          %s199 = sshll.u32 [#allocation5], 4
          %s200 = int_to_ptr.vmem [resolvable:$true] %s199
          %205 = dma.hbm_to_vmem [thread:$0]  %s198, 1024, %s200, [#allocation6], 64, 64, 4
        $region16: #{tpu_custom_call.1} parent=11 // pred_fallthru
          _
        // Predicated region
        $region17: #{tpu_custom_call.1} parent=11 // pred_check
          %p206 = pneg %p88
        $region18: #{tpu_custom_call.1} parent=11 // pred_check_branch
          %208 = sbr.rel (%p206) target = $region20
        $region19: #{tpu_custom_call.1} parent=11 // pred_region
          %210 = vsyncadd [#allocation6], 0
          %s211 = sshll.u32 %s2, 4
          %s212 = int_to_ptr.hbm [resolvable:$true] %s211
          %s213 = sshll.u32 [#allocation7], 4
          %s214 = int_to_ptr.vmem [resolvable:$true] %s213
          %219 = dma.hbm_to_vmem [thread:$0]  %s212, 1024, %s214, [#allocation6], 64, 64, 4
        $region20: #{tpu_custom_call.1} parent=11 // pred_fallthru
          _
        // Predicated region
        $region21: #{tpu_custom_call.1} parent=11 // pred_check
          %p220 = pneg %p109
        $region22: #{tpu_custom_call.1} parent=11 // pred_check_branch
          %222 = sbr.rel (%p220) target = $region24
        $region23: #{tpu_custom_call.1} parent=11 // pred_region
          %224 = vsyncadd [#allocation9], 0
          %s225 = sshll.u32 %s3, 4
          %s226 = int_to_ptr.hbm [resolvable:$true] %s225
          %s227 = sshll.u32 [#allocation8], 4
          %s228 = int_to_ptr.vmem [resolvable:$true] %s227
          %233 = dma.hbm_to_vmem [thread:$0]  %s226, 1024, %s228, [#allocation9], 64, 64, 4
        $region24: #{tpu_custom_call.1} parent=11 // pred_fallthru
          _
        // Predicated region
        $region25: #{tpu_custom_call.1} parent=11 // pred_check
          %p234 = pneg %p130
        $region26: #{tpu_custom_call.1} parent=11 // pred_check_branch
          %236 = sbr.rel (%p234) target = $region28
        $region27: #{tpu_custom_call.1} parent=11 // pred_region
          %238 = vsyncadd [#allocation9], 0
          %s239 = sshll.u32 %s4, 4
          %s240 = int_to_ptr.hbm [resolvable:$true] %s239
          %s241 = sshll.u32 [#allocation10], 4
          %s242 = int_to_ptr.vmem [resolvable:$true] %s241
          %247 = dma.hbm_to_vmem [thread:$0]  %s240, 1024, %s242, [#allocation9], 64, 64, 4
        $region28: #{tpu_custom_call.1} parent=11 // pred_fallthru
          _
        // Predicated region
        $region29: #{tpu_custom_call.1} parent=11 // pred_check
          %p248 = pneg %p151
        $region30: #{tpu_custom_call.1} parent=11 // pred_check_branch
          %250 = sbr.rel (%p248) target = $region32
        $region31: #{tpu_custom_call.1} parent=11 // pred_region
          _
        $region32: #{tpu_custom_call.1} parent=11 // pred_fallthru
          _
      $region12: #{tpu_custom_call.1} parent=5 // pred_fallthru
        _
      %p251 = scmp.lt.s32.totalorder %s20, 2
      // Predicated region
      $region33: #{tpu_custom_call.1} parent=5 // pred_check
        %p252 = pneg %p251
      $region34: #{tpu_custom_call.1} parent=5 // pred_check_branch
        %254 = sbr.rel (%p252) target = $region36
      $region35: #{tpu_custom_call.1} parent=5 // pred_region
        // Predicated region
        $region37: #{tpu_custom_call.1} parent=35 // pred_check
          %p255 = pneg %p40
        $region38: #{tpu_custom_call.1} parent=35 // pred_check_branch
          %257 = sbr.rel (%p255) target = $region40
        $region39: #{tpu_custom_call.1} parent=35 // pred_region
          %s258 = sand.u32 %s30, 1
          %s259 = scalar_lea.sflag [#allocation3], %s258
          %s260 = sand.u32 %s30, 1
          %s261 = smul.addr %s260, 128
          %s262 = scalar_lea.vmem [#allocation2], %s261
          %s263 = smul.u32 16, %s20
          %265 = vsyncadd %s259, 0
          %s266 = smul.addr %s263, 8
          %s267 = scalar_lea.hbm %s0, %s266
          %s268 = sshll.u32 %s267, 4
          %s269 = int_to_ptr.hbm [resolvable:$true] %s268
          %s270 = sshll.u32 %s262, 4
          %s271 = int_to_ptr.vmem [resolvable:$true] %s270
          %276 = dma.hbm_to_vmem [thread:$0]  %s269, 2048, %s271, %s259, 128, 128, 8
        $region40: #{tpu_custom_call.1} parent=35 // pred_fallthru
          _
      $region36: #{tpu_custom_call.1} parent=5 // pred_fallthru
        _
      %p277 = scmp.le.s32.totalorder 1, %s20
      %p278 = scmp.lt.s32.totalorder %s20, 3
      %p279 = pnand %p277, %p278
      %p280 = pneg %p279
      // Predicated region
      $region41: #{tpu_custom_call.1} parent=5 // pred_check
        _
      $region42: #{tpu_custom_call.1} parent=5 // pred_check_branch
        %282 = sbr.rel (%p279) target = $region44
      $region43: #{tpu_custom_call.1} parent=5 // pred_region
        %s283 = ssub.s32 %s20, 1
        %s284 = sand.u32 %s33, 1
        %s285 = scalar_lea.sflag [#allocation3], %s284
        %s286 = sand.u32 %s33, 1
        %s287 = smul.addr %s286, 128
        %s288 = scalar_lea.vmem [#allocation2], %s287
        // Predicated region
        $region45: #{tpu_custom_call.1} parent=43 // pred_check
          %p289 = pneg %p46
        $region46: #{tpu_custom_call.1} parent=43 // pred_check_branch
          %291 = sbr.rel (%p289) target = $region48
        $region47: #{tpu_custom_call.1} parent=43 // pred_region
          %293 = dma.done %s285, 2048
        $region48: #{tpu_custom_call.1} parent=43 // pred_fallthru
          _
        // Predicated region
        $region49: #{tpu_custom_call.1} parent=43 // pred_check
          %p294 = pneg %p67
        $region50: #{tpu_custom_call.1} parent=43 // pred_check_branch
          %296 = sbr.rel (%p294) target = $region52
        $region51: #{tpu_custom_call.1} parent=43 // pred_region
          %298 = dma.done [#allocation6], 1024
        $region52: #{tpu_custom_call.1} parent=43 // pred_fallthru
          _
        // Predicated region
        $region53: #{tpu_custom_call.1} parent=43 // pred_check
          %p299 = pneg %p88
        $region54: #{tpu_custom_call.1} parent=43 // pred_check_branch
          %301 = sbr.rel (%p299) target = $region56
        $region55: #{tpu_custom_call.1} parent=43 // pred_region
          %303 = dma.done [#allocation6], 1024
        $region56: #{tpu_custom_call.1} parent=43 // pred_fallthru
          _
        // Predicated region
        $region57: #{tpu_custom_call.1} parent=43 // pred_check
          %p304 = pneg %p109
        $region58: #{tpu_custom_call.1} parent=43 // pred_check_branch
          %306 = sbr.rel (%p304) target = $region60
        $region59: #{tpu_custom_call.1} parent=43 // pred_region
          %308 = dma.done [#allocation9], 1024
        $region60: #{tpu_custom_call.1} parent=43 // pred_fallthru
          _
        // Predicated region
        $region61: #{tpu_custom_call.1} parent=43 // pred_check
          %p309 = pneg %p130
        $region62: #{tpu_custom_call.1} parent=43 // pred_check_branch
          %311 = sbr.rel (%p309) target = $region64
        $region63: #{tpu_custom_call.1} parent=43 // pred_region
          %313 = dma.done [#allocation9], 1024
        $region64: #{tpu_custom_call.1} parent=43 // pred_fallthru
          _
        %s314 = sand.u32 %s33, 1
        %s315 = scalar_lea.sflag [#allocation3], %s314
        %s316 = sand.u32 %s33, 1
        %s317 = smul.addr %s316, 128
        %s318 = scalar_lea.vmem [#allocation2], %s317
        %p319 = pneg %p46
        %p320 = pneg %p43
        %p321 = pneg %p67
        %p322 = pneg %p64
        %p323 = pneg %p88
        %p324 = pneg %p85
        %p325 = pneg %p109
        %p326 = pneg %p106
        %p327 = pneg %p130
        %p328 = pneg %p127
        %p329 = pneg %p151
        %p330 = pneg %p148
        %p331 = pneg %p177
        %p332 = pneg %p174
        %s333 = sand.u32 %s164, 1
        %s334 = scalar_lea.sflag [#allocation4], %s333
        %s335 = sand.u32 %s164, 1
        %s336 = smul.addr %s335, 128
        %s337 = scalar_lea.vmem [#allocation11], %s336
        %s338 = smul.u32 16, %s25
        %s339 = smul.u32 16, %s25
        %v340 = vld [vmem:[%s288] sm:$0xff]
        %v341 = vld [vmem:[%s288 + $0x8] sm:$0xff]
        %v342 = vld [vmem:[%s288 + $0x10] sm:$0xff]
        %v343 = vld [vmem:[%s288 + $0x18] sm:$0xff]
        %v344 = vld [vmem:[%s288 + $0x20] sm:$0xff]
        %v345 = vld [vmem:[%s288 + $0x28] sm:$0xff]
        %v346 = vld [vmem:[%s288 + $0x30] sm:$0xff]
        %v347 = vld [vmem:[%s288 + $0x38] sm:$0xff]
        %v348 = vld [vmem:[%s288 + $0x40] sm:$0xff]
        %v349 = vld [vmem:[%s288 + $0x48] sm:$0xff]
        %v350 = vld [vmem:[%s288 + $0x50] sm:$0xff]
        %v351 = vld [vmem:[%s288 + $0x58] sm:$0xff]
        %v352 = vld [vmem:[%s288 + $0x60] sm:$0xff]
        %v353 = vld [vmem:[%s288 + $0x68] sm:$0xff]
        %v354 = vld [vmem:[%s288 + $0x70] sm:$0xff]
        %v355 = vld [vmem:[%s288 + $0x78] sm:$0xff]
        %v356 = vpack.c.bf16 %v341, %v340
        %v357 = vpack.c.bf16 %v343, %v342
        %v358 = vpack.c.bf16 %v345, %v344
        %v359 = vpack.c.bf16 %v347, %v346
        %v360 = vpack.c.bf16 %v349, %v348
        %v361 = vpack.c.bf16 %v351, %v350
        %v362 = vpack.c.bf16 %v353, %v352
        %v363 = vpack.c.bf16 %v355, %v354
        %v364 = vld [vmem:[#allocation5] sm:$0xf]
        %v365 = vld [vmem:[#allocation5 + $0x4] sm:$0xf]
        %v366 = vld [vmem:[#allocation5 + $0x8] sm:$0xf]
        %v367 = vld [vmem:[#allocation5 + $0xc] sm:$0xf]
        %v368 = vld [vmem:[#allocation5 + $0x10] sm:$0xf]
        %v369 = vld [vmem:[#allocation5 + $0x14] sm:$0xf]
        %v370 = vld [vmem:[#allocation5 + $0x18] sm:$0xf]
        %v371 = vld [vmem:[#allocation5 + $0x1c] sm:$0xf]
        %v372 = vld [vmem:[#allocation5 + $0x20] sm:$0xf]
        %v373 = vld [vmem:[#allocation5 + $0x24] sm:$0xf]
        %v374 = vld [vmem:[#allocation5 + $0x28] sm:$0xf]
        %v375 = vld [vmem:[#allocation5 + $0x2c] sm:$0xf]
        %v376 = vld [vmem:[#allocation5 + $0x30] sm:$0xf]
        %v377 = vld [vmem:[#allocation5 + $0x34] sm:$0xf]
        %v378 = vld [vmem:[#allocation5 + $0x38] sm:$0xf]
        %v379 = vld [vmem:[#allocation5 + $0x3c] sm:$0xf]
        %v380 = vld [vmem:[%s5] sm:$0x1]
        %v381 = vperm.slane %v380, 0
        %v398 = vunpack.c.l.b16 %v364
        %v399 = vunpack.c.l.b16 %v365
        %v400 = vunpack.c.l.b16 %v366
        %v401 = vunpack.c.l.b16 %v367
        %v402 = vunpack.c.l.b16 %v368
        %v403 = vunpack.c.l.b16 %v369
        %v404 = vunpack.c.l.b16 %v370
        %v405 = vunpack.c.l.b16 %v371
        %v406 = vunpack.c.l.b16 %v372
        %v407 = vunpack.c.l.b16 %v373
        %v408 = vunpack.c.l.b16 %v374
        %v409 = vunpack.c.l.b16 %v375
        %v410 = vunpack.c.l.b16 %v376
        %v411 = vunpack.c.l.b16 %v377
        %v412 = vunpack.c.l.b16 %v378
        %v413 = vunpack.c.l.b16 %v379
        %v414 = vpack.c.b16 %v399, %v398
        %v415 = vpack.c.b16 %v401, %v400
        %v416 = vpack.c.b16 %v403, %v402
        %v417 = vpack.c.b16 %v405, %v404
        %v418 = vpack.c.b16 %v407, %v406
        %v419 = vpack.c.b16 %v409, %v408
        %v420 = vpack.c.b16 %v411, %v410
        %v421 = vpack.c.b16 %v413, %v412
        %430 = vmatpush.bf16.msra.mxu0 %v421
        %431 = vmatpush.bf16.msra.mxu0 %v420
        %432 = vmatpush.bf16.msra.mxu0 %v419
        %433 = vmatpush.bf16.msra.mxu0 %v418
        %434 = vmatpush.bf16.msra.mxu0 %v417
        %435 = vmatpush.bf16.msra.mxu0 %v416
        %436 = vmatpush.bf16.msra.mxu0 %v415
        %437 = vmatpush.bf16.msra.mxu0 %v414
        %438 = vmatmul.bf16.gmra.mxu0 %v356
        %v439 = vpop.f32.mrf.mxu0
        %v440 = vadd.f32 %v381, %v439
        %v441 = vpop.f32.mrf.mxu0
        %v442 = vadd.f32 %v381, %v441
        %443 = vmatmul.bf16.gmra.mxu0 %v357
        %v444 = vpop.f32.mrf.mxu0
        %v445 = vadd.f32 %v381, %v444
        %v446 = vpop.f32.mrf.mxu0
        %v447 = vadd.f32 %v381, %v446
        %448 = vmatmul.bf16.gmra.mxu0 %v358
        %v449 = vpop.f32.mrf.mxu0
        %v450 = vadd.f32 %v381, %v449
        %v451 = vpop.f32.mrf.mxu0
        %v452 = vadd.f32 %v381, %v451
        %453 = vmatmul.bf16.gmra.mxu0 %v359
        %v454 = vpop.f32.mrf.mxu0
        %v455 = vadd.f32 %v381, %v454
        %v456 = vpop.f32.mrf.mxu0
        %v457 = vadd.f32 %v381, %v456
        %458 = vmatmul.bf16.gmra.mxu0 %v360
        %v459 = vpop.f32.mrf.mxu0
        %v460 = vadd.f32 %v381, %v459
        %v461 = vpop.f32.mrf.mxu0
        %v462 = vadd.f32 %v381, %v461
        %463 = vmatmul.bf16.gmra.mxu0 %v361
        %v464 = vpop.f32.mrf.mxu0
        %v465 = vadd.f32 %v381, %v464
        %v466 = vpop.f32.mrf.mxu0
        %v467 = vadd.f32 %v381, %v466
        %468 = vmatmul.bf16.gmra.mxu0 %v362
        %v469 = vpop.f32.mrf.mxu0
        %v470 = vadd.f32 %v381, %v469
        %v471 = vpop.f32.mrf.mxu0
        %v472 = vadd.f32 %v381, %v471
        %473 = vmatmul.bf16.gmra.mxu0 %v363
        %v474 = vpop.f32.mrf.mxu0
        %v475 = vadd.f32 %v381, %v474
        %v476 = vpop.f32.mrf.mxu0
        %v477 = vadd.f32 %v381, %v476
        %478 = vdwg.mxu0
        %v479 = vmax.f32 %v440, 0.0
        %v480 = vmax.f32 %v442, 0.0
        %v481 = vmax.f32 %v445, 0.0
        %v482 = vmax.f32 %v447, 0.0
        %v483 = vmax.f32 %v450, 0.0
        %v484 = vmax.f32 %v452, 0.0
        %v485 = vmax.f32 %v455, 0.0
        %v486 = vmax.f32 %v457, 0.0
        %v487 = vmax.f32 %v460, 0.0
        %v488 = vmax.f32 %v462, 0.0
        %v489 = vmax.f32 %v465, 0.0
        %v490 = vmax.f32 %v467, 0.0
        %v491 = vmax.f32 %v470, 0.0
        %v492 = vmax.f32 %v472, 0.0
        %v493 = vmax.f32 %v475, 0.0
        %v494 = vmax.f32 %v477, 0.0
        %v495 = vpack.c.bf16 %v480, %v479
        %v496 = vpack.c.bf16 %v482, %v481
        %v497 = vpack.c.bf16 %v484, %v483
        %v498 = vpack.c.bf16 %v486, %v485
        %v499 = vpack.c.bf16 %v488, %v487
        %v500 = vpack.c.bf16 %v490, %v489
        %v501 = vpack.c.bf16 %v492, %v491
        %v502 = vpack.c.bf16 %v494, %v493
        %v503 = vld [vmem:[#allocation7] sm:$0xf]
        %v504 = vld [vmem:[#allocation7 + $0x4] sm:$0xf]
        %v505 = vld [vmem:[#allocation7 + $0x8] sm:$0xf]
        %v506 = vld [vmem:[#allocation7 + $0xc] sm:$0xf]
        %v507 = vld [vmem:[#allocation7 + $0x10] sm:$0xf]
        %v508 = vld [vmem:[#allocation7 + $0x14] sm:$0xf]
        %v509 = vld [vmem:[#allocation7 + $0x18] sm:$0xf]
        %v510 = vld [vmem:[#allocation7 + $0x1c] sm:$0xf]
        %v511 = vld [vmem:[#allocation7 + $0x20] sm:$0xf]
        %v512 = vld [vmem:[#allocation7 + $0x24] sm:$0xf]
        %v513 = vld [vmem:[#allocation7 + $0x28] sm:$0xf]
        %v514 = vld [vmem:[#allocation7 + $0x2c] sm:$0xf]
        %v515 = vld [vmem:[#allocation7 + $0x30] sm:$0xf]
        %v516 = vld [vmem:[#allocation7 + $0x34] sm:$0xf]
        %v517 = vld [vmem:[#allocation7 + $0x38] sm:$0xf]
        %v518 = vld [vmem:[#allocation7 + $0x3c] sm:$0xf]
        %v519 = vld [vmem:[%s5 + $0x1] sm:$0x1]
        %v520 = vperm.slane %v519, 0
        %v537 = vunpack.c.l.b16 %v503
        %v538 = vunpack.c.l.b16 %v504
        %v539 = vunpack.c.l.b16 %v505
        %v540 = vunpack.c.l.b16 %v506
        %v541 = vunpack.c.l.b16 %v507
        %v542 = vunpack.c.l.b16 %v508
        %v543 = vunpack.c.l.b16 %v509
        %v544 = vunpack.c.l.b16 %v510
        %v545 = vunpack.c.l.b16 %v511
        %v546 = vunpack.c.l.b16 %v512
        %v547 = vunpack.c.l.b16 %v513
        %v548 = vunpack.c.l.b16 %v514
        %v549 = vunpack.c.l.b16 %v515
        %v550 = vunpack.c.l.b16 %v516
        %v551 = vunpack.c.l.b16 %v517
        %v552 = vunpack.c.l.b16 %v518
        %v553 = vpack.c.b16 %v538, %v537
        %v554 = vpack.c.b16 %v540, %v539
        %v555 = vpack.c.b16 %v542, %v541
        %v556 = vpack.c.b16 %v544, %v543
        %v557 = vpack.c.b16 %v546, %v545
        %v558 = vpack.c.b16 %v548, %v547
        %v559 = vpack.c.b16 %v550, %v549
        %v560 = vpack.c.b16 %v552, %v551
        %569 = vmatpush.bf16.msra.mxu0 %v560
        %570 = vmatpush.bf16.msra.mxu0 %v559
        %571 = vmatpush.bf16.msra.mxu0 %v558
        %572 = vmatpush.bf16.msra.mxu0 %v557
        %573 = vmatpush.bf16.msra.mxu0 %v556
        %574 = vmatpush.bf16.msra.mxu0 %v555
        %575 = vmatpush.bf16.msra.mxu0 %v554
        %576 = vmatpush.bf16.msra.mxu0 %v553
        %577 = vmatmul.bf16.gmra.mxu0 %v495
        %v578 = vpop.f32.mrf.mxu0
        %v579 = vadd.f32 %v520, %v578
        %v580 = vpop.f32.mrf.mxu0
        %v581 = vadd.f32 %v520, %v580
        %582 = vmatmul.bf16.gmra.mxu0 %v496
        %v583 = vpop.f32.mrf.mxu0
        %v584 = vadd.f32 %v520, %v583
        %v585 = vpop.f32.mrf.mxu0
        %v586 = vadd.f32 %v520, %v585
        %587 = vmatmul.bf16.gmra.mxu0 %v497
        %v588 = vpop.f32.mrf.mxu0
        %v589 = vadd.f32 %v520, %v588
        %v590 = vpop.f32.mrf.mxu0
        %v591 = vadd.f32 %v520, %v590
        %592 = vmatmul.bf16.gmra.mxu0 %v498
        %v593 = vpop.f32.mrf.mxu0
        %v594 = vadd.f32 %v520, %v593
        %v595 = vpop.f32.mrf.mxu0
        %v596 = vadd.f32 %v520, %v595
        %597 = vmatmul.bf16.gmra.mxu0 %v499
        %v598 = vpop.f32.mrf.mxu0
        %v599 = vadd.f32 %v520, %v598
        %v600 = vpop.f32.mrf.mxu0
        %v601 = vadd.f32 %v520, %v600
        %602 = vmatmul.bf16.gmra.mxu0 %v500
        %v603 = vpop.f32.mrf.mxu0
        %v604 = vadd.f32 %v520, %v603
        %v605 = vpop.f32.mrf.mxu0
        %v606 = vadd.f32 %v520, %v605
        %607 = vmatmul.bf16.gmra.mxu0 %v501
        %v608 = vpop.f32.mrf.mxu0
        %v609 = vadd.f32 %v520, %v608
        %v610 = vpop.f32.mrf.mxu0
        %v611 = vadd.f32 %v520, %v610
        %612 = vmatmul.bf16.gmra.mxu0 %v502
        %v613 = vpop.f32.mrf.mxu0
        %v614 = vadd.f32 %v520, %v613
        %v615 = vpop.f32.mrf.mxu0
        %v616 = vadd.f32 %v520, %v615
        %617 = vdwg.mxu0
        %v618 = vmax.f32 %v579, 0.0
        %v619 = vmax.f32 %v581, 0.0
        %v620 = vmax.f32 %v584, 0.0
        %v621 = vmax.f32 %v586, 0.0
        %v622 = vmax.f32 %v589, 0.0
        %v623 = vmax.f32 %v591, 0.0
        %v624 = vmax.f32 %v594, 0.0
        %v625 = vmax.f32 %v596, 0.0
        %v626 = vmax.f32 %v599, 0.0
        %v627 = vmax.f32 %v601, 0.0
        %v628 = vmax.f32 %v604, 0.0
        %v629 = vmax.f32 %v606, 0.0
        %v630 = vmax.f32 %v609, 0.0
        %v631 = vmax.f32 %v611, 0.0
        %v632 = vmax.f32 %v614, 0.0
        %v633 = vmax.f32 %v616, 0.0
        %v634 = vpack.c.bf16 %v619, %v618
        %v635 = vpack.c.bf16 %v621, %v620
        %v636 = vpack.c.bf16 %v623, %v622
        %v637 = vpack.c.bf16 %v625, %v624
        %v638 = vpack.c.bf16 %v627, %v626
        %v639 = vpack.c.bf16 %v629, %v628
        %v640 = vpack.c.bf16 %v631, %v630
        %v641 = vpack.c.bf16 %v633, %v632
        %v642 = vld [vmem:[#allocation8] sm:$0xf]
        %v643 = vld [vmem:[#allocation8 + $0x4] sm:$0xf]
        %v644 = vld [vmem:[#allocation8 + $0x8] sm:$0xf]
        %v645 = vld [vmem:[#allocation8 + $0xc] sm:$0xf]
        %v646 = vld [vmem:[#allocation8 + $0x10] sm:$0xf]
        %v647 = vld [vmem:[#allocation8 + $0x14] sm:$0xf]
        %v648 = vld [vmem:[#allocation8 + $0x18] sm:$0xf]
        %v649 = vld [vmem:[#allocation8 + $0x1c] sm:$0xf]
        %v650 = vld [vmem:[#allocation8 + $0x20] sm:$0xf]
        %v651 = vld [vmem:[#allocation8 + $0x24] sm:$0xf]
        %v652 = vld [vmem:[#allocation8 + $0x28] sm:$0xf]
        %v653 = vld [vmem:[#allocation8 + $0x2c] sm:$0xf]
        %v654 = vld [vmem:[#allocation8 + $0x30] sm:$0xf]
        %v655 = vld [vmem:[#allocation8 + $0x34] sm:$0xf]
        %v656 = vld [vmem:[#allocation8 + $0x38] sm:$0xf]
        %v657 = vld [vmem:[#allocation8 + $0x3c] sm:$0xf]
        %v658 = vld [vmem:[%s5 + $0x2] sm:$0x1]
        %v659 = vperm.slane %v658, 0
        %v676 = vunpack.c.l.b16 %v642
        %v677 = vunpack.c.l.b16 %v643
        %v678 = vunpack.c.l.b16 %v644
        %v679 = vunpack.c.l.b16 %v645
        %v680 = vunpack.c.l.b16 %v646
        %v681 = vunpack.c.l.b16 %v647
        %v682 = vunpack.c.l.b16 %v648
        %v683 = vunpack.c.l.b16 %v649
        %v684 = vunpack.c.l.b16 %v650
        %v685 = vunpack.c.l.b16 %v651
        %v686 = vunpack.c.l.b16 %v652
        %v687 = vunpack.c.l.b16 %v653
        %v688 = vunpack.c.l.b16 %v654
        %v689 = vunpack.c.l.b16 %v655
        %v690 = vunpack.c.l.b16 %v656
        %v691 = vunpack.c.l.b16 %v657
        %v692 = vpack.c.b16 %v677, %v676
        %v693 = vpack.c.b16 %v679, %v678
        %v694 = vpack.c.b16 %v681, %v680
        %v695 = vpack.c.b16 %v683, %v682
        %v696 = vpack.c.b16 %v685, %v684
        %v697 = vpack.c.b16 %v687, %v686
        %v698 = vpack.c.b16 %v689, %v688
        %v699 = vpack.c.b16 %v691, %v690
        %708 = vmatpush.bf16.msra.mxu0 %v699
        %709 = vmatpush.bf16.msra.mxu0 %v698
        %710 = vmatpush.bf16.msra.mxu0 %v697
        %711 = vmatpush.bf16.msra.mxu0 %v696
        %712 = vmatpush.bf16.msra.mxu0 %v695
        %713 = vmatpush.bf16.msra.mxu0 %v694
        %714 = vmatpush.bf16.msra.mxu0 %v693
        %715 = vmatpush.bf16.msra.mxu0 %v692
        %716 = vmatmul.bf16.gmra.mxu0 %v634
        %v717 = vpop.f32.mrf.mxu0
        %v718 = vadd.f32 %v659, %v717
        %v719 = vpop.f32.mrf.mxu0
        %v720 = vadd.f32 %v659, %v719
        %721 = vmatmul.bf16.gmra.mxu0 %v635
        %v722 = vpop.f32.mrf.mxu0
        %v723 = vadd.f32 %v659, %v722
        %v724 = vpop.f32.mrf.mxu0
        %v725 = vadd.f32 %v659, %v724
        %726 = vmatmul.bf16.gmra.mxu0 %v636
        %v727 = vpop.f32.mrf.mxu0
        %v728 = vadd.f32 %v659, %v727
        %v729 = vpop.f32.mrf.mxu0
        %v730 = vadd.f32 %v659, %v729
        %731 = vmatmul.bf16.gmra.mxu0 %v637
        %v732 = vpop.f32.mrf.mxu0
        %v733 = vadd.f32 %v659, %v732
        %v734 = vpop.f32.mrf.mxu0
        %v735 = vadd.f32 %v659, %v734
        %736 = vmatmul.bf16.gmra.mxu0 %v638
        %v737 = vpop.f32.mrf.mxu0
        %v738 = vadd.f32 %v659, %v737
        %v739 = vpop.f32.mrf.mxu0
        %v740 = vadd.f32 %v659, %v739
        %741 = vmatmul.bf16.gmra.mxu0 %v639
        %v742 = vpop.f32.mrf.mxu0
        %v743 = vadd.f32 %v659, %v742
        %v744 = vpop.f32.mrf.mxu0
        %v745 = vadd.f32 %v659, %v744
        %746 = vmatmul.bf16.gmra.mxu0 %v640
        %v747 = vpop.f32.mrf.mxu0
        %v748 = vadd.f32 %v659, %v747
        %v749 = vpop.f32.mrf.mxu0
        %v750 = vadd.f32 %v659, %v749
        %751 = vmatmul.bf16.gmra.mxu0 %v641
        %v752 = vpop.f32.mrf.mxu0
        %v753 = vadd.f32 %v659, %v752
        %v754 = vpop.f32.mrf.mxu0
        %v755 = vadd.f32 %v659, %v754
        %756 = vdwg.mxu0
        %v757 = vmax.f32 %v718, 0.0
        %v758 = vmax.f32 %v720, 0.0
        %v759 = vmax.f32 %v723, 0.0
        %v760 = vmax.f32 %v725, 0.0
        %v761 = vmax.f32 %v728, 0.0
        %v762 = vmax.f32 %v730, 0.0
        %v763 = vmax.f32 %v733, 0.0
        %v764 = vmax.f32 %v735, 0.0
        %v765 = vmax.f32 %v738, 0.0
        %v766 = vmax.f32 %v740, 0.0
        %v767 = vmax.f32 %v743, 0.0
        %v768 = vmax.f32 %v745, 0.0
        %v769 = vmax.f32 %v748, 0.0
        %v770 = vmax.f32 %v750, 0.0
        %v771 = vmax.f32 %v753, 0.0
        %v772 = vmax.f32 %v755, 0.0
        %v773 = vpack.c.bf16 %v758, %v757
        %v774 = vpack.c.bf16 %v760, %v759
        %v775 = vpack.c.bf16 %v762, %v761
        %v776 = vpack.c.bf16 %v764, %v763
        %v777 = vpack.c.bf16 %v766, %v765
        %v778 = vpack.c.bf16 %v768, %v767
        %v779 = vpack.c.bf16 %v770, %v769
        %v780 = vpack.c.bf16 %v772, %v771
        %v781 = vld [vmem:[#allocation10] sm:$0xf]
        %v782 = vld [vmem:[#allocation10 + $0x4] sm:$0xf]
        %v783 = vld [vmem:[#allocation10 + $0x8] sm:$0xf]
        %v784 = vld [vmem:[#allocation10 + $0xc] sm:$0xf]
        %v785 = vld [vmem:[#allocation10 + $0x10] sm:$0xf]
        %v786 = vld [vmem:[#allocation10 + $0x14] sm:$0xf]
        %v787 = vld [vmem:[#allocation10 + $0x18] sm:$0xf]
        %v788 = vld [vmem:[#allocation10 + $0x1c] sm:$0xf]
        %v789 = vld [vmem:[#allocation10 + $0x20] sm:$0xf]
        %v790 = vld [vmem:[#allocation10 + $0x24] sm:$0xf]
        %v791 = vld [vmem:[#allocation10 + $0x28] sm:$0xf]
        %v792 = vld [vmem:[#allocation10 + $0x2c] sm:$0xf]
        %v793 = vld [vmem:[#allocation10 + $0x30] sm:$0xf]
        %v794 = vld [vmem:[#allocation10 + $0x34] sm:$0xf]
        %v795 = vld [vmem:[#allocation10 + $0x38] sm:$0xf]
        %v796 = vld [vmem:[#allocation10 + $0x3c] sm:$0xf]
        %v797 = vld [vmem:[%s5 + $0x3] sm:$0x1]
        %v798 = vperm.slane %v797, 0
        %v815 = vunpack.c.l.b16 %v781
        %v816 = vunpack.c.l.b16 %v782
        %v817 = vunpack.c.l.b16 %v783
        %v818 = vunpack.c.l.b16 %v784
        %v819 = vunpack.c.l.b16 %v785
        %v820 = vunpack.c.l.b16 %v786
        %v821 = vunpack.c.l.b16 %v787
        %v822 = vunpack.c.l.b16 %v788
        %v823 = vunpack.c.l.b16 %v789
        %v824 = vunpack.c.l.b16 %v790
        %v825 = vunpack.c.l.b16 %v791
        %v826 = vunpack.c.l.b16 %v792
        %v827 = vunpack.c.l.b16 %v793
        %v828 = vunpack.c.l.b16 %v794
        %v829 = vunpack.c.l.b16 %v795
        %v830 = vunpack.c.l.b16 %v796
        %v831 = vpack.c.b16 %v816, %v815
        %v832 = vpack.c.b16 %v818, %v817
        %v833 = vpack.c.b16 %v820, %v819
        %v834 = vpack.c.b16 %v822, %v821
        %v835 = vpack.c.b16 %v824, %v823
        %v836 = vpack.c.b16 %v826, %v825
        %v837 = vpack.c.b16 %v828, %v827
        %v838 = vpack.c.b16 %v830, %v829
        %847 = vmatpush.bf16.msra.mxu0 %v838
        %848 = vmatpush.bf16.msra.mxu0 %v837
        %849 = vmatpush.bf16.msra.mxu0 %v836
        %850 = vmatpush.bf16.msra.mxu0 %v835
        %851 = vmatpush.bf16.msra.mxu0 %v834
        %852 = vmatpush.bf16.msra.mxu0 %v833
        %853 = vmatpush.bf16.msra.mxu0 %v832
        %854 = vmatpush.bf16.msra.mxu0 %v831
        %855 = vmatmul.bf16.gmra.mxu0 %v773
        %v856 = vpop.f32.mrf.mxu0
        %v857 = vadd.f32 %v798, %v856
        %v858 = vpop.f32.mrf.mxu0
        %v859 = vadd.f32 %v798, %v858
        %860 = vmatmul.bf16.gmra.mxu0 %v774
        %v861 = vpop.f32.mrf.mxu0
        %v862 = vadd.f32 %v798, %v861
        %v863 = vpop.f32.mrf.mxu0
        %v864 = vadd.f32 %v798, %v863
        %865 = vmatmul.bf16.gmra.mxu0 %v775
        %v866 = vpop.f32.mrf.mxu0
        %v867 = vadd.f32 %v798, %v866
        %v868 = vpop.f32.mrf.mxu0
        %v869 = vadd.f32 %v798, %v868
        %870 = vmatmul.bf16.gmra.mxu0 %v776
        %v871 = vpop.f32.mrf.mxu0
        %v872 = vadd.f32 %v798, %v871
        %v873 = vpop.f32.mrf.mxu0
        %v874 = vadd.f32 %v798, %v873
        %875 = vmatmul.bf16.gmra.mxu0 %v777
        %v876 = vpop.f32.mrf.mxu0
        %v877 = vadd.f32 %v798, %v876
        %v878 = vpop.f32.mrf.mxu0
        %v879 = vadd.f32 %v798, %v878
        %880 = vmatmul.bf16.gmra.mxu0 %v778
        %v881 = vpop.f32.mrf.mxu0
        %v882 = vadd.f32 %v798, %v881
        %v883 = vpop.f32.mrf.mxu0
        %v884 = vadd.f32 %v798, %v883
        %885 = vmatmul.bf16.gmra.mxu0 %v779
        %v886 = vpop.f32.mrf.mxu0
        %v887 = vadd.f32 %v798, %v886
        %v888 = vpop.f32.mrf.mxu0
        %v889 = vadd.f32 %v798, %v888
        %890 = vmatmul.bf16.gmra.mxu0 %v780
        %v891 = vpop.f32.mrf.mxu0
        %v892 = vadd.f32 %v798, %v891
        %v893 = vpop.f32.mrf.mxu0
        %v894 = vadd.f32 %v798, %v893
        %895 = vdwg.mxu0
        %896 = vst [vmem:[%s337] sm:$0xff] %v857
        %897 = vst [vmem:[%s337 + $0x8] sm:$0xff] %v859
        %898 = vst [vmem:[%s337 + $0x10] sm:$0xff] %v862
        %899 = vst [vmem:[%s337 + $0x18] sm:$0xff] %v864
        %900 = vst [vmem:[%s337 + $0x20] sm:$0xff] %v867
        %901 = vst [vmem:[%s337 + $0x28] sm:$0xff] %v869
        %902 = vst [vmem:[%s337 + $0x30] sm:$0xff] %v872
        %903 = vst [vmem:[%s337 + $0x38] sm:$0xff] %v874
        %904 = vst [vmem:[%s337 + $0x40] sm:$0xff] %v877
        %905 = vst [vmem:[%s337 + $0x48] sm:$0xff] %v879
        %906 = vst [vmem:[%s337 + $0x50] sm:$0xff] %v882
        %907 = vst [vmem:[%s337 + $0x58] sm:$0xff] %v884
        %908 = vst [vmem:[%s337 + $0x60] sm:$0xff] %v887
        %909 = vst [vmem:[%s337 + $0x68] sm:$0xff] %v889
        %910 = vst [vmem:[%s337 + $0x70] sm:$0xff] %v892
        %911 = vst [vmem:[%s337 + $0x78] sm:$0xff] %v894
        %s912 = sand.u32 %s164, 1
        %s913 = scalar_lea.sflag [#allocation4], %s912
        %s914 = sand.u32 %s164, 1
        %s915 = smul.addr %s914, 128
        %s916 = scalar_lea.vmem [#allocation11], %s915
        // Predicated region
        $region65: #{tpu_custom_call.1} parent=43 // pred_check
          %p917 = pneg %p174
        $region66: #{tpu_custom_call.1} parent=43 // pred_check_branch
          %919 = sbr.rel (%p917) target = $region68
        $region67: #{tpu_custom_call.1} parent=43 // pred_region
          %s920 = smul.u32 16, %s25
          %922 = vsyncadd %s913, 0
          %s923 = smul.addr %s920, 8
          %s924 = scalar_lea.hbm %s6, %s923
          %s925 = sshll.u32 %s916, 4
          %s926 = int_to_ptr.vmem [resolvable:$true] %s925
          %s927 = sshll.u32 %s924, 4
          %s928 = int_to_ptr.hbm [resolvable:$true] %s927
          %933 = dma.vmem_to_hbm [thread:$0]  %s926, 2048, %s928, %s913, 128, 128, 8
        $region68: #{tpu_custom_call.1} parent=43 // pred_fallthru
          _
      $region44: #{tpu_custom_call.1} parent=5 // pred_fallthru
        _
      %p934 = scmp.le.s32.totalorder 2, %s20
      // Predicated region
      $region69: #{tpu_custom_call.1} parent=5 // pred_check
        %p935 = pneg %p934
      $region70: #{tpu_custom_call.1} parent=5 // pred_check_branch
        %937 = sbr.rel (%p935) target = $region72
      $region71: #{tpu_custom_call.1} parent=5 // pred_region
        %s938 = ssub.s32 %s20, 2
        // Predicated region
        $region73: #{tpu_custom_call.1} parent=71 // pred_check
          %p939 = pneg %p180
        $region74: #{tpu_custom_call.1} parent=71 // pred_check_branch
          %941 = sbr.rel (%p939) target = $region76
        $region75: #{tpu_custom_call.1} parent=71 // pred_region
          %s942 = sand.u32 %s165, 1
          %s943 = scalar_lea.sflag [#allocation4], %s942
          %s944 = sand.u32 %s165, 1
          %s945 = smul.addr %s944, 128
          %s946 = scalar_lea.vmem [#allocation11], %s945
          %948 = dma.done %s943, 2048
        $region76: #{tpu_custom_call.1} parent=71 // pred_fallthru
          _
      $region72: #{tpu_custom_call.1} parent=5 // pred_fallthru
        _
    $region6: #{tpu_custom_call.1} parent=1 // loop_footer
      %s24 = sadd.s32 1, %s20
    $region7: #{tpu_custom_call.1} parent=1 // loop_footer_branch
      %19 = sbr.rel target = $region3
    $region8: #{tpu_custom_call.1} parent=1 // loop_exit
      _
    %949 = vsyncpa [#allocation3], 1
    %s950 = scalar_lea.sflag [#allocation3], 1
    %951 = vsyncpa %s950, 1
    %952 = vsyncpa [#allocation6], 1
    %953 = vsyncpa [#allocation9], 1
    %954 = vsyncpa [#allocation4], 1
    %s955 = scalar_lea.sflag [#allocation4], 1
    %956 = vsyncpa %s955, 1

</llo_original>
